<compile_context>
chip_gen: v7x
topology: tpu7x:2x2x1
jax: 0.10.0
libtpu: 0.0.40
codegen_flags: <defaults>
</compile_context>

<pallas_src>
import jax
import jax.numpy as jnp
from jax.experimental import pallas as pl
from jax.experimental.pallas import tpu as pltpu


def _mlp_head_kernel(x_ref, w1_ref, b1_ref, w2_ref, b2_ref, o_ref):
    """One batch tile of:  squeeze(ReLU(x @ W1 + b1) @ W2 + b2, 1).

    x_ref : (tb, emb_dim)   VMEM (pipelined over the batch grid axis)
    w1_ref: (emb_dim, hid)  VMEM (resident, constant index_map)
    b1_ref: (1, hid)        VMEM
    w2_ref: (1, hid)        VMEM  -- second-layer weight as a lane-dense row
    b2_ref: (1,)            SMEM scalar (f32)
    o_ref : (tb, 1)         VMEM
    """
    # First linear: MXU matmul with f32 accumulation.
    h = jnp.dot(x_ref[...], w1_ref[...], preferred_element_type=jnp.float32)
    h = jnp.maximum(h + b1_ref[...].astype(jnp.float32), 0.0)  # bias + ReLU (VPU)

    # Second linear (hid -> 1): VPU multiply + lane reduction instead of an
    # N=1 MXU matmul -- uses otherwise-idle VPU/XLU slots, keeps MXU free.
    out = jnp.sum(h * w2_ref[...].astype(jnp.float32), axis=-1, keepdims=True)

    o_ref[...] = (out + b2_ref[0]).astype(o_ref.dtype)


def _choose_tb(batch, emb_dim, hid, itemsize, vmem_budget_bytes=40 << 20):
    """Pick the biggest batch tile that keeps (double-buffered x tile + resident
    weights + f32 hidden intermediate) under a conservative per-core VMEM budget.
    Works for v7x's 64 MiB VMEM as well as v5e/v6e's 128 MiB."""
    gran = 16 if itemsize < 4 else 8                       # sublane packing granularity
    fixed = 2 * (emb_dim * hid + 2 * hid) * itemsize       # weights/biases (double-buffered)
    per_row = 2 * emb_dim * itemsize + hid * 4 + 2 * 4     # x (x2 bufs) + f32 hidden + out
    tb_cap = max(gran, (vmem_budget_bytes - fixed) // per_row)
    tb = min(1024, tb_cap, -(-batch // gran) * gran)       # <=1024 rows; round small batch up
    tb = max(gran, (tb // gran) * gran)
    return int(tb)


def linear_head_forward(emb, w1, b1, w2, b2, *, tb=None):
    """emb: (batch, emb_dim) -> (batch,) popularity counts.

    Weights are stored pre-transposed: w1 (emb_dim, hid), w2 (hid, 1).
    emb / w1 / b1 / w2 may be float32 or bfloat16 (f32 accumulation either way).
    """
    batch, emb_dim = emb.shape
    hid = w1.shape[1]
    itemsize = jnp.dtype(emb.dtype).itemsize

    if tb is None:
        tb = _choose_tb(batch, emb_dim, hid, itemsize)

    # Pad the batch so it tiles evenly (cheap relative to the HBM read).
    padded = -(-batch // tb) * tb
    if padded != batch:
        emb = jnp.pad(emb, ((0, padded - batch), (0, 0)))

    b1_2d = b1.reshape(1, hid)
    w2_row = w2.reshape(1, hid)                 # lane-dense row for the VPU path
    b2_smem = b2.reshape(1).astype(jnp.float32)  # scalar via SMEM

    num_tiles = padded // tb
    flops = 2 * padded * emb_dim * hid + 3 * padded * hid
    bytes_accessed = (
        padded * emb_dim * itemsize            # emb read
        + (emb_dim * hid + 2 * hid) * itemsize  # weights/biases
        + padded * itemsize                    # output write
    )

    out = pl.pallas_call(
        _mlp_head_kernel,
        out_shape=jax.ShapeDtypeStruct((padded, 1), emb.dtype),
        grid_spec=pltpu.PrefetchScalarGridSpec(
            num_scalar_prefetch=0,
            grid=(num_tiles,),
            in_specs=[
                pl.BlockSpec((tb, emb_dim), lambda i: (i, 0)),      # x tile (pipelined)
                pl.BlockSpec((emb_dim, hid), lambda i: (0, 0)),     # W1 (resident)
                pl.BlockSpec((1, hid), lambda i: (0, 0)),           # b1
                pl.BlockSpec((1, hid), lambda i: (0, 0)),           # W2 as a row
                pl.BlockSpec(memory_space=pltpu.MemorySpace.SMEM),  # b2 scalar
            ],
            out_specs=pl.BlockSpec((tb, 1), lambda i: (i, 0)),
        ),
        compiler_params=pltpu.CompilerParams(
            dimension_semantics=("parallel",),   # megacore: batch tiles across TCs
            vmem_limit_bytes=64 << 20,           # explicit scoped limit (<= v7x physical)
        ),
        cost_estimate=pl.CostEstimate(
            flops=flops, transcendentals=0, bytes_accessed=bytes_accessed),
    )(emb, w1, b1_2d, w2_row, b2_smem)

    return jnp.squeeze(out, axis=1)[:batch]


def init_params(key, emb_dim, dtype=jnp.float32):
    """Deterministic synthetic parameters matching nn.Linear shapes
    (stored transposed: (in, out))."""
    hid = emb_dim // 2
    k1, k2, k3, k4 = jax.random.split(key, 4)
    s1 = 1.0 / jnp.sqrt(emb_dim)
    s2 = 1.0 / jnp.sqrt(hid)
    w1 = jax.random.uniform(k1, (emb_dim, hid), dtype, -s1, s1)
    b1 = jax.random.uniform(k2, (hid,), dtype, -s1, s1)
    w2 = jax.random.uniform(k3, (hid, 1), dtype, -s2, s2)
    b2 = jax.random.uniform(k4, (1,), dtype, -s2, s2)
    return w1, b1, w2, b2


def _reference(emb, w1, b1, w2, b2):
    return jnp.squeeze(jnp.maximum(emb @ w1 + b1, 0.0) @ w2 + b2, axis=1)


if __name__ == "__main__":
    emb_dim = 32
    key = jax.random.PRNGKey(0)
    k_emb, k_params, k_emb2 = jax.random.split(key, 3)
    w1, b1, w2, b2 = init_params(k_params, emb_dim)

    # Case 1: small, tile-aligned batch.
    batch = 8
    emb = jax.random.normal(k_emb, (batch, emb_dim), jnp.float32)
    out = jax.block_until_ready(linear_head_forward(emb, w1, b1, w2, b2))
    ref = _reference(emb, w1, b1, w2, b2)
    assert out.shape == (batch,)
    assert jnp.allclose(out, ref, atol=1e-5, rtol=1e-5)

    # Case 2: batch not divisible by the tile granularity (exercises padding path).
    batch2 = 20
    emb2 = jax.random.normal(k_emb2, (batch2, emb_dim), jnp.float32)
    out2 = jax.block_until_ready(linear_head_forward(emb2, w1, b1, w2, b2))
    ref2 = _reference(emb2, w1, b1, w2, b2)
    assert out2.shape == (batch2,)
    assert jnp.allclose(out2, ref2, atol=1e-5, rtol=1e-5)

    print("KERNEL_OK")
</pallas_src>

<mosaic_0001>
module attributes {stable_mosaic.version = 11 : i64} {
  func.func @_mlp_head_kernel(%arg0: i32, %arg1: memref<8x32xf32, #tpu.memory_space<vmem>>, %arg2: memref<32x16xf32, #tpu.memory_space<vmem>>, %arg3: memref<1x16xf32, #tpu.memory_space<vmem>>, %arg4: memref<1x16xf32, #tpu.memory_space<vmem>>, %arg5: memref<1xf32, #tpu.memory_space<smem>>, %arg6: memref<8x1xf32, #tpu.memory_space<vmem>>) attributes {dimension_semantics = [#tpu.dimension_semantics<parallel>], iteration_bounds = array<i64: 1>, scalar_prefetch = 0 : i64, scratch_operands = 0 : i64, tpu.core_type = #tpu.core_type<tc>, window_params = [{transform_indices = @transform_0, window_bounds = array<i64: 8, 32>}, {pipeline_mode = #tpu.pipeline_mode<synchronous>, transform_indices = @transform_1, window_bounds = array<i64: 32, 16>}, {pipeline_mode = #tpu.pipeline_mode<synchronous>, transform_indices = @transform_2, window_bounds = array<i64: 1, 16>}, {pipeline_mode = #tpu.pipeline_mode<synchronous>, transform_indices = @transform_3, window_bounds = array<i64: 1, 16>}, {transform_indices = @transform_4, window_bounds = array<i64: 1>}, {transform_indices = @transform_5, window_bounds = array<i64: 8, 1>}]} {
    %c0 = arith.constant 0 : index
    %c0_0 = arith.constant 0 : index
    %0 = vector.load %arg1[%c0, %c0_0] : memref<8x32xf32, #tpu.memory_space<vmem>>, vector<8x32xf32>
    %c0_1 = arith.constant 0 : index
    %c0_2 = arith.constant 0 : index
    %1 = vector.load %arg2[%c0_1, %c0_2] : memref<32x16xf32, #tpu.memory_space<vmem>>, vector<32x16xf32>
    %cst = arith.constant dense<0.000000e+00> : vector<8x16xf32>
    %2 = tpu.matmul %0, %1, %cst {dimension_numbers = #tpu.dot_dimension_numbers<[1], [0], [0], [1], [0, 0, 1, 1], [], []>} : vector<8x32xf32>, vector<32x16xf32>, vector<8x16xf32> -> vector<8x16xf32>
    %c0_3 = arith.constant 0 : index
    %c0_4 = arith.constant 0 : index
    %3 = vector.load %arg3[%c0_3, %c0_4] : memref<1x16xf32, #tpu.memory_space<vmem>>, vector<1x16xf32>
    %4 = vector.broadcast %3 : vector<1x16xf32> to vector<8x16xf32>
    %5 = arith.addf %2, %4 : vector<8x16xf32>
    %cst_5 = arith.constant 0.000000e+00 : f32
    %6 = vector.broadcast %cst_5 : f32 to vector<8x16xf32>
    %7 = arith.maximumf %5, %6 : vector<8x16xf32>
    %c0_6 = arith.constant 0 : index
    %c0_7 = arith.constant 0 : index
    %8 = vector.load %arg4[%c0_6, %c0_7] : memref<1x16xf32, #tpu.memory_space<vmem>>, vector<1x16xf32>
    %9 = vector.broadcast %8 : vector<1x16xf32> to vector<8x16xf32>
    %10 = arith.mulf %7, %9 : vector<8x16xf32>
    %cst_8 = arith.constant dense<0.000000e+00> : vector<8xf32>
    %11 = vector.multi_reduction <add>, %10, %cst_8 [1] : vector<8x16xf32> to vector<8xf32>
    %12 = vector.shape_cast %11 : vector<8xf32> to vector<8x1xf32>
    %c0_9 = arith.constant 0 : index
    %13 = memref.load %arg5[%c0_9] : memref<1xf32, #tpu.memory_space<smem>>
    %14 = vector.broadcast %13 : f32 to vector<8x1xf32>
    %15 = arith.addf %12, %14 : vector<8x1xf32>
    %c0_10 = arith.constant 0 : index
    %c0_11 = arith.constant 0 : index
    %16 = vector.load %arg6[%c0_10, %c0_11] : memref<8x1xf32, #tpu.memory_space<vmem>>, vector<8x1xf32>
    tpu.vector_store %arg6[%c0_10, %c0_11], %15 {strides = array<i32>} : memref<8x1xf32, #tpu.memory_space<vmem>>, vector<8x1xf32>,
    return
  }
  func.func @transform_0(%arg0: i32) -> (i32, i32) {
    %c0_i32 = arith.constant 0 : i32
    %c0_i32_0 = arith.constant 0 : i32
    return %arg0, %c0_i32 : i32, i32
  }
  func.func @transform_1(%arg0: i32) -> (i32, i32) {
    %c0_i32 = arith.constant 0 : i32
    %c0_i32_0 = arith.constant 0 : i32
    %c0_i32_1 = arith.constant 0 : i32
    return %c0_i32, %c0_i32_0 : i32, i32
  }
  func.func @transform_2(%arg0: i32) -> (i32, i32) {
    %c0_i32 = arith.constant 0 : i32
    %c0_i32_0 = arith.constant 0 : i32
    %c0_i32_1 = arith.constant 0 : i32
    return %c0_i32, %c0_i32_0 : i32, i32
  }
  func.func @transform_3(%arg0: i32) -> (i32, i32) {
    %c0_i32 = arith.constant 0 : i32
    %c0_i32_0 = arith.constant 0 : i32
    %c0_i32_1 = arith.constant 0 : i32
    return %c0_i32, %c0_i32_0 : i32, i32
  }
  func.func @transform_4(%arg0: i32) -> i32 {
    %c0_i32 = arith.constant 0 : i32
    %c0_i32_0 = arith.constant 0 : i32
    return %c0_i32 : i32
  }
  func.func @transform_5(%arg0: i32) -> (i32, i32) {
    %c0_i32 = arith.constant 0 : i32
    %c0_i32_0 = arith.constant 0 : i32
    return %arg0, %c0_i32 : i32, i32
  }
}

</mosaic_0001>

<llo_original>
// kernel: tpu_custom_call.1
$region0: #{tpu_custom_call.1}
  #allocation0 [shape = 'u32[]', space=smem, size = 0x4, offset = 0x4, fixed_abs, tag = 'smem constant byte address 0x4 - core index']
  #allocation1 [shape = 'u32[144,128]{1,0:T(1,128)}', space=vmem, size = 0x12000, scoped, tag = 'internal scratch']
  #allocation2 [shape = 'f32[1]{0:T(128)S(6)}', space=smem, size = 0x200, scoped, tag = 'scoped memory for tpu_custom_call.1']
  %s0 = inlined_call_operand.hbm [shape: f32[8,32], index: 0, kind: input, shape index: {}]
  %s1 = inlined_call_operand.hbm [shape: f32[32,16], index: 1, kind: input, shape index: {}]
  %s2 = inlined_call_operand.hbm [shape: f32[1,16], index: 2, kind: input, shape index: {}]
  %s3 = inlined_call_operand.hbm [shape: f32[1,16], index: 3, kind: input, shape index: {}]
  %s4 = inlined_call_operand.<no memory space> [shape: f32[1], index: 4, kind: input, shape index: {}]
  %s5 = inlined_call_operand.hbm [shape: f32[8,1], index: 5, kind: output, shape index: {}]
  %s6 = sld [smem:[#allocation0]]
  $region46: #{tpu_custom_call.1} parent=0
    _
  %s8 = ssub.s32 1, %s6
  %s9 = scalar_select 0, %s8, %s6
  %10 = sst [smem:[#allocation2]] %s4
  $region1: #{tpu_custom_call.1} parent=0
    #allocation3 [shape = 'u8[4096]{0}', space=vmem, size = 0x1000, scoped, tag = 'input window, operand 0, single buffered']
    #allocation4 [shape = 's32[1]{0}', space=sflag, size = 0x4, scoped, tag = 'scoped memory for tpu_custom_call.1']
    #allocation5 [shape = 's32[1]{0}', space=sflag, size = 0x4, scoped, tag = 'scoped memory for tpu_custom_call.1']
    #allocation6 [shape = 'u8[16384]{0}', space=vmem, size = 0x4000, scoped, tag = 'input window, operand 1, single buffered']
    #allocation7 [shape = 's32[1]{0}', space=sflag, size = 0x4, scoped, tag = 'scoped memory for tpu_custom_call.1']
    #allocation8 [shape = 'u8[512]{0}', space=vmem, size = 0x400, scoped, tag = 'input window, operand 2, single buffered']
    #allocation9 [shape = 'u8[512]{0}', space=vmem, size = 0x400, scoped, tag = 'input window, operand 3, single buffered']
    #allocation10 [shape = 's32[1]{0}', space=sflag, size = 0x4, scoped, tag = 'scoped memory for tpu_custom_call.1']
    #allocation11 [shape = 'u8[4096]{0}', space=vmem, size = 0x1000, scoped, tag = 'output window, operand 0, single buffered']
    %11 = vsyncpa [#allocation4], 0
    %12 = vsyncpa [#allocation7], 0
    %13 = vsyncpa [#allocation10], 0
    %14 = vsyncpa [#allocation5], 0
    // Predicated region
    $region2: #{tpu_custom_call.1} parent=1 // pred_check
      _
    $region3: #{tpu_custom_call.1} parent=1 // pred_check_branch
      %16 = sbr.rel (0) target = $region5
    $region4: #{tpu_custom_call.1} parent=1 // pred_region
      %s18 = ssub.s32 128, 128
      %19 = vsyncadd [#allocation4], %s18
      %s21 = sshll.u32 [#allocation3], 4
      %s22 = int_to_ptr.vmem [resolvable:$true] %s21
      %24 = dma.hbm_to_vmem [thread:$0]  %s0, 128, %s22, [#allocation4]
    $region5: #{tpu_custom_call.1} parent=1 // pred_fallthru
      _
    // Predicated region
    $region6: #{tpu_custom_call.1} parent=1 // pred_check
      _
    $region7: #{tpu_custom_call.1} parent=1 // pred_check_branch
      %26 = sbr.rel (0) target = $region9
    $region8: #{tpu_custom_call.1} parent=1 // pred_region
      %s28 = ssub.s32 512, 512
      %29 = vsyncadd [#allocation7], %s28
      %s30 = sshll.u32 [#allocation6], 4
      %s31 = int_to_ptr.vmem [resolvable:$true] %s30
      %36 = dma.hbm_to_vmem [thread:$0]  %s1, 512, %s31, [#allocation7], 128, 128, 8
    $region9: #{tpu_custom_call.1} parent=1 // pred_fallthru
      _
    // Predicated region
    $region10: #{tpu_custom_call.1} parent=1 // pred_check
      _
    $region11: #{tpu_custom_call.1} parent=1 // pred_check_branch
      %38 = sbr.rel (0) target = $region13
    $region12: #{tpu_custom_call.1} parent=1 // pred_region
      %s40 = ssub.s32 16, 16
      %41 = vsyncadd [#allocation7], %s40
      %s43 = sshll.u32 [#allocation8], 4
      %s44 = int_to_ptr.vmem [resolvable:$true] %s43
      %46 = dma.hbm_to_vmem [thread:$0]  %s2, 16, %s44, [#allocation7]
    $region13: #{tpu_custom_call.1} parent=1 // pred_fallthru
      _
    // Predicated region
    $region14: #{tpu_custom_call.1} parent=1 // pred_check
      _
    $region15: #{tpu_custom_call.1} parent=1 // pred_check_branch
      %48 = sbr.rel (0) target = $region17
    $region16: #{tpu_custom_call.1} parent=1 // pred_region
      %s50 = ssub.s32 16, 16
      %51 = vsyncadd [#allocation10], %s50
      %s53 = sshll.u32 [#allocation9], 4
      %s54 = int_to_ptr.vmem [resolvable:$true] %s53
      %56 = dma.hbm_to_vmem [thread:$0]  %s3, 16, %s54, [#allocation10]
    $region17: #{tpu_custom_call.1} parent=1 // pred_fallthru
      _
    // Predicated region
    $region18: #{tpu_custom_call.1} parent=1 // pred_check
      _
    $region19: #{tpu_custom_call.1} parent=1 // pred_check_branch
      %58 = sbr.rel (0) target = $region21
    $region20: #{tpu_custom_call.1} parent=1 // pred_region
      _
    $region21: #{tpu_custom_call.1} parent=1 // pred_fallthru
      _
    // Predicated region
    $region22: #{tpu_custom_call.1} parent=1 // pred_check
      _
    $region23: #{tpu_custom_call.1} parent=1 // pred_check_branch
      %60 = sbr.rel (0) target = $region25
    $region24: #{tpu_custom_call.1} parent=1 // pred_region
      %61 = dma.done [#allocation4], 128
    $region25: #{tpu_custom_call.1} parent=1 // pred_fallthru
      _
    // Predicated region
    $region26: #{tpu_custom_call.1} parent=1 // pred_check
      _
    $region27: #{tpu_custom_call.1} parent=1 // pred_check_branch
      %63 = sbr.rel (0) target = $region29
    $region28: #{tpu_custom_call.1} parent=1 // pred_region
      %64 = dma.done [#allocation7], 512
    $region29: #{tpu_custom_call.1} parent=1 // pred_fallthru
      _
    // Predicated region
    $region30: #{tpu_custom_call.1} parent=1 // pred_check
      _
    $region31: #{tpu_custom_call.1} parent=1 // pred_check_branch
      %66 = sbr.rel (0) target = $region33
    $region32: #{tpu_custom_call.1} parent=1 // pred_region
      %67 = dma.done [#allocation7], 16
    $region33: #{tpu_custom_call.1} parent=1 // pred_fallthru
      _
    // Predicated region
    $region34: #{tpu_custom_call.1} parent=1 // pred_check
      _
    $region35: #{tpu_custom_call.1} parent=1 // pred_check_branch
      %69 = sbr.rel (0) target = $region37
    $region36: #{tpu_custom_call.1} parent=1 // pred_region
      %70 = dma.done [#allocation10], 16
    $region37: #{tpu_custom_call.1} parent=1 // pred_fallthru
      _
    %v71 = vld [vmem:[#allocation3] sm:$0xff]
    %v72 = vld [vmem:[#allocation6] sm:$0xff]
    %v73 = vld [vmem:[#allocation6 + $0x8] sm:$0xff]
    %v74 = vld [vmem:[#allocation6 + $0x10] sm:$0xff]
    %v75 = vld [vmem:[#allocation6 + $0x18] sm:$0xff]
    %v76 = vld [vmem:[#allocation8] sm:$0x1]
    %v78 = vlaneseq
    %v79 = vshrl.u32 %v78, 7
    %v80 = vsub.s32 0, %v79
    %v81 = vrot.slane %v76, %v80
    %vm83 = vcmask 261120
    %v85 = vsel %vm83, %v71, 0
    %87 = vmatprep.subr.mxu0 0.0
    %88 = vmatpush1.msra.mxu0 %v72
    %89 = vmatprep.subr.mxu0 0.0
    %90 = vmatpush1.msra.mxu0 %v73
    %91 = vmatprep.subr.mxu0 0.0
    %92 = vmatpush1.msra.mxu0 %v74
    %93 = vmatprep.subr.mxu0 0.0
    %94 = vmatpush1.msra.mxu0 %v75
    %95 = vmatprep.subr.mxu0 0.0
    %96 = vmatpush1.msra.mxu0 0.0
    %97 = vmatprep.subr.mxu0 0.0
    %98 = vmatpush1.msra.mxu0 0.0
    %99 = vmatprep.subr.mxu0 0.0
    %100 = vmatpush1.msra.mxu0 0.0
    %101 = vmatprep.subr.mxu0 0.0
    %102 = vmatpush1.msra.mxu0 0.0
    %103 = vmatprep.subr.mxu0 0.0
    %104 = vmatpush1.msra.mxu0 0.0
    %105 = vmatprep.subr.mxu0 0.0
    %106 = vmatpush1.msra.mxu0 0.0
    %107 = vmatprep.subr.mxu0 0.0
    %108 = vmatpush1.msra.mxu0 0.0
    %109 = vmatprep.subr.mxu0 0.0
    %110 = vmatpush1.msra.mxu0 0.0
    %111 = vmatprep.subr.mxu0 0.0
    %112 = vmatpush1.msra.mxu0 0.0
    %113 = vmatprep.subr.mxu0 0.0
    %114 = vmatpush1.msra.mxu0 0.0
    %115 = vmatprep.subr.mxu0 0.0
    %116 = vmatpush1.msra.mxu0 0.0
    %117 = vmatprep.subr.mxu0 0.0
    %118 = vmatpush1.msra.mxu0 0.0
    %119 = vmatprep.subr.mxu0 0.0
    %120 = vmatpush1.msra.mxu0 0.0
    %121 = vmatprep.subr.mxu0 0.0
    %122 = vmatpush1.msra.mxu0 0.0
    %123 = vmatprep.subr.mxu0 0.0
    %124 = vmatpush1.msra.mxu0 0.0
    %125 = vmatprep.subr.mxu0 0.0
    %126 = vmatpush1.msra.mxu0 0.0
    %127 = vmatprep.subr.mxu0 0.0
    %128 = vmatpush1.msra.mxu0 0.0
    %129 = vmatprep.subr.mxu0 0.0
    %130 = vmatpush1.msra.mxu0 0.0
    %131 = vmatprep.subr.mxu0 0.0
    %132 = vmatpush1.msra.mxu0 0.0
    %133 = vmatprep.subr.mxu0 0.0
    %134 = vmatpush1.msra.mxu0 0.0
    %135 = vmatprep.subr.mxu0 0.0
    %136 = vmatpush1.msra.mxu0 0.0
    %137 = vmatprep.subr.mxu0 0.0
    %138 = vmatpush1.msra.mxu0 0.0
    %139 = vmatprep.subr.mxu0 0.0
    %140 = vmatpush1.msra.mxu0 0.0
    %141 = vmatprep.subr.mxu0 0.0
    %142 = vmatpush1.msra.mxu0 0.0
    %143 = vmatprep.subr.mxu0 0.0
    %144 = vmatpush1.msra.mxu0 0.0
    %145 = vmatprep.subr.mxu0 0.0
    %146 = vmatpush1.msra.mxu0 0.0
    %147 = vmatprep.subr.mxu0 0.0
    %148 = vmatpush1.msra.mxu0 0.0
    %149 = vmatprep.subr.mxu0 0.0
    %150 = vmatpush1.msra.mxu0 0.0
    %151 = vmatprep.mubr.f32.mxu0 0.0
    %152 = vmatmul.mubr.f32.gmra.mrb[0].mxu0 %v85
    %v153 = vpop.f32.mrb[0].mxu0
    %v154 = vadd.f32 %v81, %v153
    %v155 = vpop.f32.mrb[0].mxu0
    %156 = vdwg.mxu0
    %v157 = vmax.f32 %v154, 0.0
    %v158 = vld [vmem:[#allocation9] sm:$0x1]
    %v160 = vlaneseq
    %v161 = vshrl.u32 %v160, 7
    %v162 = vsub.s32 0, %v161
    %v163 = vrot.slane %v158, %v162
    %v165 = vmul.f32 %v157, %v163
    %vm166 = vcmask 130048
    %v167 = vsel %vm166, %v165, 0.0
    %168 = vadd.xlane.f32.xlu0 %v167
    %v169 = vpop.xlane.xlu0 %168
    %s170 = sld [smem:[#allocation2]]
    %v171 = vstv %s170
    %v172 = vadd.f32 %v169, %v171
    %vm173 = vcmask 7168
    %174 = vst.msk [vmem:[#allocation11] sm:$0xff] %vm173, %v172
    // Predicated region
    $region38: #{tpu_custom_call.1} parent=1 // pred_check
      _
    $region39: #{tpu_custom_call.1} parent=1 // pred_check_branch
      %176 = sbr.rel (0) target = $region41
    $region40: #{tpu_custom_call.1} parent=1 // pred_region
      %s178 = ssub.s32 128, 128
      %179 = vsyncadd [#allocation5], %s178
      %s181 = sshll.u32 [#allocation11], 4
      %s182 = int_to_ptr.vmem [resolvable:$true] %s181
      %184 = dma.vmem_to_hbm [thread:$0]  %s182, 128, %s5, [#allocation5]
    $region41: #{tpu_custom_call.1} parent=1 // pred_fallthru
      _
    // Predicated region
    $region42: #{tpu_custom_call.1} parent=1 // pred_check
      _
    $region43: #{tpu_custom_call.1} parent=1 // pred_check_branch
      %186 = sbr.rel (0) target = $region45
    $region44: #{tpu_custom_call.1} parent=1 // pred_region
      %187 = dma.done [#allocation5], 128
    $region45: #{tpu_custom_call.1} parent=1 // pred_fallthru
      _
    %188 = vsyncpa [#allocation4], 1
    %189 = vsyncpa [#allocation7], 1
    %190 = vsyncpa [#allocation10], 1
    %191 = vsyncpa [#allocation5], 1

</llo_original>
